<compile_context>
chip_gen: v7x
topology: tpu7x:2x2x1
jax: 0.10.0
libtpu: 0.0.40
codegen_flags: <defaults>
</compile_context>

<pallas_src>
import jax
import jax.numpy as jnp
from jax.experimental import pallas as pl
from jax.experimental.pallas import tpu as pltpu


def fpn_combine_kernel(x0_ref, x1_ref, w_ref, b_ref, r_ref, o_ref):
    # Channel-major, lane-dense layout:
    #   x0_ref: (N, C0, H*W)     input 0 (needs 1x1 channel projection, already output size)
    #   x1_ref: (N, C,  H2*W2)   input 1 (needs nearest 2x upsample)
    #   w_ref : (C, C0)          1x1 conv weight, pre-scaled by softmax weight nw[0]
    #   b_ref : (C, 1)           1x1 conv bias,   pre-scaled by nw[0]
    #   r_ref : (H2*W2, H*W)     0/1 nearest-upsample replication matrix, pre-scaled by nw[1]
    #   o_ref : (N, C, H*W)
    n_batch = x0_ref.shape[0]
    w = w_ref[...]
    b = b_ref[...]
    r = r_ref[...]
    for n in range(n_batch):  # tiny static batch -> unrolled, single grid step
        node0 = jnp.dot(w, x0_ref[n], preferred_element_type=jnp.float32)   # (C, H*W) MXU
        node1 = jnp.dot(x1_ref[n], r, preferred_element_type=jnp.float32)   # (C, H*W) MXU
        o_ref[n] = (node0 + node1 + b).astype(o_ref.dtype)


def fpn_combine(x0_nchw, x1_nchw, conv_w, conv_b, edge_weights):
    """FpnCombine.forward for the config above. Inputs/outputs are NCHW."""
    dtype = x0_nchw.dtype
    N, C0, H, W = x0_nchw.shape
    _, C, H2, W2 = x1_nchw.shape
    # Nearest upsample below assumes integer scale factors (true for this config).
    assert H % H2 == 0 and W % W2 == 0, (H, W, H2, W2)
    sh, sw = H // H2, W // W2
    HW, HW2 = H * W, H2 * W2

    # softmax over the edge-weight vector, computed in the input dtype (as in torch).
    nw = jax.nn.softmax(edge_weights.astype(dtype), axis=0).astype(jnp.float32)

    # NCHW is already channel-major: only free reshapes, no transposes.
    x0 = x0_nchw.reshape(N, C0, HW)
    x1 = x1_nchw.reshape(N, C, HW2)

    # Fold softmax weight 0 into the (tiny, constant) 1x1-conv weight and bias.
    # torch conv weight is (C_out, C_in, 1, 1) -> (C, C0) matmul weight directly.
    w = (conv_w.reshape(C, C0).astype(jnp.float32) * nw[0]).astype(dtype)
    b = (conv_b.reshape(C, 1).astype(jnp.float32) * nw[0]).astype(dtype)

    # Nearest-neighbor upsample as a constant replication matmul, scaled by nw[1]:
    #   node1[c, ih*W+iw] = x1[c, (ih//sh)*W2 + (iw//sw)]  ->  node1 = x1 @ R
    cols = jnp.arange(HW)
    src = (cols // W // sh) * W2 + (cols % W) // sw
    r = ((jnp.arange(HW2)[:, None] == src[None, :]).astype(jnp.float32) * nw[1]).astype(dtype)

    flops = 2 * N * HW * C * C0 + 2 * N * HW * C * HW2
    bytes_accessed = 4 * (x0.size + x1.size + w.size + b.size + r.size + N * C * HW)

    out = pl.pallas_call(
        fpn_combine_kernel,
        out_shape=jax.ShapeDtypeStruct((N, C, HW), dtype),
        grid_spec=pltpu.PrefetchScalarGridSpec(
            num_scalar_prefetch=0,
            grid=(1,),
            in_specs=[
                pl.BlockSpec((N, C0, HW), lambda i: (0, 0, 0)),
                pl.BlockSpec((N, C, HW2), lambda i: (0, 0, 0)),
                pl.BlockSpec((C, C0), lambda i: (0, 0)),
                pl.BlockSpec((C, 1), lambda i: (0, 0)),
                pl.BlockSpec((HW2, HW), lambda i: (0, 0)),
            ],
            out_specs=pl.BlockSpec((N, C, HW), lambda i: (0, 0, 0)),
        ),
        compiler_params=pltpu.CompilerParams(dimension_semantics=("arbitrary",)),
        cost_estimate=pl.CostEstimate(
            flops=flops, transcendentals=0, bytes_accessed=bytes_accessed),
    )(x0, x1, w, b, r)

    return out.reshape(N, C, H, W)  # free reshape back to NCHW


def reference(x0_nchw, x1_nchw, conv_w, conv_b, edge_weights):
    """Pure-JAX reference of FpnCombine.forward (NCHW, like the torch module)."""
    node0 = jax.lax.conv_general_dilated(
        x0_nchw, conv_w, window_strides=(1, 1), padding="VALID",
        dimension_numbers=("NCHW", "OIHW", "NCHW"))
    node0 = node0 + conv_b.reshape(1, -1, 1, 1)
    sh = x0_nchw.shape[2] // x1_nchw.shape[2]
    sw = x0_nchw.shape[3] // x1_nchw.shape[3]
    node1 = jnp.repeat(jnp.repeat(x1_nchw, sh, axis=2), sw, axis=3)
    nw = jax.nn.softmax(edge_weights.astype(x0_nchw.dtype), axis=0)
    out = jnp.stack([node0, node1], axis=-1) * nw
    return jnp.sum(out, axis=-1)


if __name__ == "__main__":
    key = jax.random.PRNGKey(0)
    k0, k1, k2, k3 = jax.random.split(key, 4)

    N, C0, C, H, W = 2, 16, 8, 16, 16
    x0 = jax.random.normal(k0, (N, C0, H, W), jnp.float32)           # feature_info[0]
    x1 = jax.random.normal(k1, (N, C, H // 2, W // 2), jnp.float32)  # feature_info[1]

    # Deterministic synthetic parameters (shapes from the module's __init__).
    conv_w = 0.1 * jax.random.normal(k2, (C, C0, 1, 1), jnp.float32)  # 1x1 conv weight
    conv_b = 0.1 * jax.random.normal(k3, (C,), jnp.float32)           # 1x1 conv bias
    edge_weights = jnp.ones((2,), jnp.float32)  # nn.Parameter(torch.ones(len(inputs_offsets)))

    out = fpn_combine(x0, x1, conv_w, conv_b, edge_weights)
    jax.block_until_ready(out)

    ref = reference(x0, x1, conv_w, conv_b, edge_weights)
    assert out.shape == (N, C, H, W), out.shape
    assert jnp.allclose(out, ref, atol=1e-3, rtol=1e-3), float(jnp.max(jnp.abs(out - ref)))

    print("KERNEL_OK")
</pallas_src>

<mosaic_0001>
module attributes {stable_mosaic.version = 11 : i64} {
  func.func @fpn_combine_kernel(%arg0: i32, %arg1: memref<2x16x256xf32, #tpu.memory_space<vmem>>, %arg2: memref<2x8x64xf32, #tpu.memory_space<vmem>>, %arg3: memref<8x16xf32, #tpu.memory_space<vmem>>, %arg4: memref<8x1xf32, #tpu.memory_space<vmem>>, %arg5: memref<64x256xf32, #tpu.memory_space<vmem>>, %arg6: memref<2x8x256xf32, #tpu.memory_space<vmem>>) attributes {dimension_semantics = [#tpu.dimension_semantics<arbitrary>], iteration_bounds = array<i64: 1>, scalar_prefetch = 0 : i64, scratch_operands = 0 : i64, tpu.core_type = #tpu.core_type<tc>, window_params = [{pipeline_mode = #tpu.pipeline_mode<synchronous>, transform_indices = @transform_0, window_bounds = array<i64: 2, 16, 256>}, {pipeline_mode = #tpu.pipeline_mode<synchronous>, transform_indices = @transform_1, window_bounds = array<i64: 2, 8, 64>}, {pipeline_mode = #tpu.pipeline_mode<synchronous>, transform_indices = @transform_2, window_bounds = array<i64: 8, 16>}, {pipeline_mode = #tpu.pipeline_mode<synchronous>, transform_indices = @transform_3, window_bounds = array<i64: 8, 1>}, {pipeline_mode = #tpu.pipeline_mode<synchronous>, transform_indices = @transform_4, window_bounds = array<i64: 64, 256>}, {pipeline_mode = #tpu.pipeline_mode<synchronous>, transform_indices = @transform_5, window_bounds = array<i64: 2, 8, 256>}]} {
    %c0 = arith.constant 0 : index
    %c0_0 = arith.constant 0 : index
    %0 = vector.load %arg3[%c0, %c0_0] : memref<8x16xf32, #tpu.memory_space<vmem>>, vector<8x16xf32>
    %c0_1 = arith.constant 0 : index
    %c0_2 = arith.constant 0 : index
    %1 = vector.load %arg4[%c0_1, %c0_2] : memref<8x1xf32, #tpu.memory_space<vmem>>, vector<8x1xf32>
    %c0_3 = arith.constant 0 : index
    %c0_4 = arith.constant 0 : index
    %2 = vector.load %arg5[%c0_3, %c0_4] : memref<64x256xf32, #tpu.memory_space<vmem>>, vector<64x256xf32>
    %c0_5 = arith.constant 0 : index
    %c0_6 = arith.constant 0 : index
    %c0_7 = arith.constant 0 : index
    %3 = vector.load %arg1[%c0_5, %c0_6, %c0_7] : memref<2x16x256xf32, #tpu.memory_space<vmem>>, vector<1x16x256xf32>
    %4 = vector.shape_cast %3 : vector<1x16x256xf32> to vector<16x256xf32>
    %cst = arith.constant dense<0.000000e+00> : vector<8x256xf32>
    %5 = tpu.matmul %0, %4, %cst {dimension_numbers = #tpu.dot_dimension_numbers<[1], [0], [0], [1], [0, 0, 1, 1], [], []>} : vector<8x16xf32>, vector<16x256xf32>, vector<8x256xf32> -> vector<8x256xf32>
    %c0_8 = arith.constant 0 : index
    %c0_9 = arith.constant 0 : index
    %c0_10 = arith.constant 0 : index
    %6 = vector.load %arg2[%c0_8, %c0_9, %c0_10] : memref<2x8x64xf32, #tpu.memory_space<vmem>>, vector<1x8x64xf32>
    %7 = vector.shape_cast %6 : vector<1x8x64xf32> to vector<8x64xf32>
    %cst_11 = arith.constant dense<0.000000e+00> : vector<8x256xf32>
    %8 = tpu.matmul %7, %2, %cst_11 {dimension_numbers = #tpu.dot_dimension_numbers<[1], [0], [0], [1], [0, 0, 1, 1], [], []>} : vector<8x64xf32>, vector<64x256xf32>, vector<8x256xf32> -> vector<8x256xf32>
    %9 = arith.addf %5, %8 : vector<8x256xf32>
    %10 = vector.broadcast %1 : vector<8x1xf32> to vector<8x256xf32>
    %11 = arith.addf %9, %10 : vector<8x256xf32>
    %c0_12 = arith.constant 0 : index
    %c0_13 = arith.constant 0 : index
    %c0_14 = arith.constant 0 : index
    %12 = vector.load %arg6[%c0_12, %c0_13, %c0_14] : memref<2x8x256xf32, #tpu.memory_space<vmem>>, vector<1x8x256xf32>
    %13 = vector.shape_cast %12 : vector<1x8x256xf32> to vector<8x256xf32>
    %14 = vector.shape_cast %11 : vector<8x256xf32> to vector<1x8x256xf32>
    tpu.vector_store %arg6[%c0_12, %c0_13, %c0_14], %14 {strides = array<i32>} : memref<2x8x256xf32, #tpu.memory_space<vmem>>, vector<1x8x256xf32>,
    %c1 = arith.constant 1 : index
    %c0_15 = arith.constant 0 : index
    %c0_16 = arith.constant 0 : index
    %15 = vector.load %arg1[%c1, %c0_15, %c0_16] : memref<2x16x256xf32, #tpu.memory_space<vmem>>, vector<1x16x256xf32>
    %16 = vector.shape_cast %15 : vector<1x16x256xf32> to vector<16x256xf32>
    %cst_17 = arith.constant dense<0.000000e+00> : vector<8x256xf32>
    %17 = tpu.matmul %0, %16, %cst_17 {dimension_numbers = #tpu.dot_dimension_numbers<[1], [0], [0], [1], [0, 0, 1, 1], [], []>} : vector<8x16xf32>, vector<16x256xf32>, vector<8x256xf32> -> vector<8x256xf32>
    %c1_18 = arith.constant 1 : index
    %c0_19 = arith.constant 0 : index
    %c0_20 = arith.constant 0 : index
    %18 = vector.load %arg2[%c1_18, %c0_19, %c0_20] : memref<2x8x64xf32, #tpu.memory_space<vmem>>, vector<1x8x64xf32>
    %19 = vector.shape_cast %18 : vector<1x8x64xf32> to vector<8x64xf32>
    %cst_21 = arith.constant dense<0.000000e+00> : vector<8x256xf32>
    %20 = tpu.matmul %19, %2, %cst_21 {dimension_numbers = #tpu.dot_dimension_numbers<[1], [0], [0], [1], [0, 0, 1, 1], [], []>} : vector<8x64xf32>, vector<64x256xf32>, vector<8x256xf32> -> vector<8x256xf32>
    %21 = arith.addf %17, %20 : vector<8x256xf32>
    %22 = vector.broadcast %1 : vector<8x1xf32> to vector<8x256xf32>
    %23 = arith.addf %21, %22 : vector<8x256xf32>
    %c1_22 = arith.constant 1 : index
    %c0_23 = arith.constant 0 : index
    %c0_24 = arith.constant 0 : index
    %24 = vector.load %arg6[%c1_22, %c0_23, %c0_24] : memref<2x8x256xf32, #tpu.memory_space<vmem>>, vector<1x8x256xf32>
    %25 = vector.shape_cast %24 : vector<1x8x256xf32> to vector<8x256xf32>
    %26 = vector.shape_cast %23 : vector<8x256xf32> to vector<1x8x256xf32>
    tpu.vector_store %arg6[%c1_22, %c0_23, %c0_24], %26 {strides = array<i32>} : memref<2x8x256xf32, #tpu.memory_space<vmem>>, vector<1x8x256xf32>,
    return
  }
  func.func @transform_0(%arg0: i32) -> (i32, i32, i32) {
    %c0_i32 = arith.constant 0 : i32
    %c0_i32_0 = arith.constant 0 : i32
    %c0_i32_1 = arith.constant 0 : i32
    %c0_i32_2 = arith.constant 0 : i32
    return %c0_i32, %c0_i32_0, %c0_i32_1 : i32, i32, i32
  }
  func.func @transform_1(%arg0: i32) -> (i32, i32, i32) {
    %c0_i32 = arith.constant 0 : i32
    %c0_i32_0 = arith.constant 0 : i32
    %c0_i32_1 = arith.constant 0 : i32
    %c0_i32_2 = arith.constant 0 : i32
    return %c0_i32, %c0_i32_0, %c0_i32_1 : i32, i32, i32
  }
  func.func @transform_2(%arg0: i32) -> (i32, i32) {
    %c0_i32 = arith.constant 0 : i32
    %c0_i32_0 = arith.constant 0 : i32
    %c0_i32_1 = arith.constant 0 : i32
    return %c0_i32, %c0_i32_0 : i32, i32
  }
  func.func @transform_3(%arg0: i32) -> (i32, i32) {
    %c0_i32 = arith.constant 0 : i32
    %c0_i32_0 = arith.constant 0 : i32
    %c0_i32_1 = arith.constant 0 : i32
    return %c0_i32, %c0_i32_0 : i32, i32
  }
  func.func @transform_4(%arg0: i32) -> (i32, i32) {
    %c0_i32 = arith.constant 0 : i32
    %c0_i32_0 = arith.constant 0 : i32
    %c0_i32_1 = arith.constant 0 : i32
    return %c0_i32, %c0_i32_0 : i32, i32
  }
  func.func @transform_5(%arg0: i32) -> (i32, i32, i32) {
    %c0_i32 = arith.constant 0 : i32
    %c0_i32_0 = arith.constant 0 : i32
    %c0_i32_1 = arith.constant 0 : i32
    %c0_i32_2 = arith.constant 0 : i32
    return %c0_i32, %c0_i32_0, %c0_i32_1 : i32, i32, i32
  }
}

</mosaic_0001>

<llo_original>
// kernel: tpu_custom_call.1
$region0: #{tpu_custom_call.1}
  #allocation0 [shape = 'u32[]', space=smem, size = 0x4, offset = 0x4, fixed_abs, tag = 'smem constant byte address 0x4 - core index']
  #allocation1 [shape = 'u32[144,128]{1,0:T(1,128)}', space=vmem, size = 0x12000, scoped, tag = 'internal scratch']
  %s0 = inlined_call_operand.hbm [shape: f32[2,16,256], index: 0, kind: input, shape index: {}]
  %s1 = inlined_call_operand.hbm [shape: f32[2,8,64], index: 1, kind: input, shape index: {}]
  %s2 = inlined_call_operand.vmem [shape: f32[8,16], index: 2, kind: input, shape index: {}]
  %s3 = inlined_call_operand.vmem [shape: f32[8,1], index: 3, kind: input, shape index: {}]
  %s4 = inlined_call_operand.hbm [shape: f32[64,256], index: 4, kind: input, shape index: {}]
  %s5 = inlined_call_operand.hbm [shape: f32[2,8,256], index: 5, kind: output, shape index: {}]
  %s6 = sld [smem:[#allocation0]]
  $region42: #{tpu_custom_call.1} parent=0
    _
  %s8 = ssub.s32 1, %s6
  %s9 = scalar_select 0, %s8, %s6
  $region1: #{tpu_custom_call.1} parent=0
    #allocation2 [shape = 'u8[32768]{0}', space=vmem, size = 0x8000, scoped, tag = 'input window, operand 0, single buffered']
    #allocation3 [shape = 's32[1]{0}', space=sflag, size = 0x4, scoped, tag = 'scoped memory for tpu_custom_call.1']
    #allocation4 [shape = 's32[1]{0}', space=sflag, size = 0x4, scoped, tag = 'scoped memory for tpu_custom_call.1']
    #allocation5 [shape = 'u8[8192]{0}', space=vmem, size = 0x2000, scoped, tag = 'input window, operand 1, single buffered']
    #allocation6 [shape = 's32[1]{0}', space=sflag, size = 0x4, scoped, tag = 'scoped memory for tpu_custom_call.1']
    #allocation7 [shape = 'u8[65536]{0}', space=vmem, size = 0x10000, scoped, tag = 'input window, operand 4, single buffered']
    #allocation8 [shape = 'u8[16384]{0}', space=vmem, size = 0x4000, scoped, tag = 'output window, operand 0, single buffered']
    %10 = vsyncpa [#allocation3], 0
    %11 = vsyncpa [#allocation6], 0
    %12 = vsyncpa [#allocation4], 0
    // Predicated region
    $region2: #{tpu_custom_call.1} parent=1 // pred_check
      _
    $region3: #{tpu_custom_call.1} parent=1 // pred_check_branch
      %14 = sbr.rel (0) target = $region5
    $region4: #{tpu_custom_call.1} parent=1 // pred_region
      %s16 = ssub.s32 1024, 1024
      %17 = vsyncadd [#allocation3], %s16
      %s18 = sshll.u32 [#allocation2], 4
      %s19 = int_to_ptr.vmem [resolvable:$true] %s18
      %24 = dma.hbm_to_vmem [thread:$0]  %s0, 1024, %s19, [#allocation3], 256, 256, 16
    $region5: #{tpu_custom_call.1} parent=1 // pred_fallthru
      _
    // Predicated region
    $region6: #{tpu_custom_call.1} parent=1 // pred_check
      _
    $region7: #{tpu_custom_call.1} parent=1 // pred_check_branch
      %26 = sbr.rel (0) target = $region9
    $region8: #{tpu_custom_call.1} parent=1 // pred_region
      %s28 = ssub.s32 256, 256
      %29 = vsyncadd [#allocation6], %s28
      %s30 = sshll.u32 [#allocation5], 4
      %s31 = int_to_ptr.vmem [resolvable:$true] %s30
      %36 = dma.hbm_to_vmem [thread:$0]  %s1, 256, %s31, [#allocation6], 128, 128, 8
    $region9: #{tpu_custom_call.1} parent=1 // pred_fallthru
      _
    // Predicated region
    $region10: #{tpu_custom_call.1} parent=1 // pred_check
      _
    $region11: #{tpu_custom_call.1} parent=1 // pred_check_branch
      %38 = sbr.rel (0) target = $region13
    $region12: #{tpu_custom_call.1} parent=1 // pred_region
      _
    $region13: #{tpu_custom_call.1} parent=1 // pred_fallthru
      _
    // Predicated region
    $region14: #{tpu_custom_call.1} parent=1 // pred_check
      _
    $region15: #{tpu_custom_call.1} parent=1 // pred_check_branch
      %40 = sbr.rel (0) target = $region17
    $region16: #{tpu_custom_call.1} parent=1 // pred_region
      _
    $region17: #{tpu_custom_call.1} parent=1 // pred_fallthru
      _
    // Predicated region
    $region18: #{tpu_custom_call.1} parent=1 // pred_check
      _
    $region19: #{tpu_custom_call.1} parent=1 // pred_check_branch
      %42 = sbr.rel (0) target = $region21
    $region20: #{tpu_custom_call.1} parent=1 // pred_region
      %s44 = ssub.s32 2048, 2048
      %45 = vsyncadd [#allocation6], %s44
      %s46 = sshll.u32 [#allocation7], 4
      %s47 = int_to_ptr.vmem [resolvable:$true] %s46
      %52 = dma.hbm_to_vmem [thread:$0]  %s4, 2048, %s47, [#allocation6], 256, 256, 16
    $region21: #{tpu_custom_call.1} parent=1 // pred_fallthru
      _
    // Predicated region
    $region22: #{tpu_custom_call.1} parent=1 // pred_check
      _
    $region23: #{tpu_custom_call.1} parent=1 // pred_check_branch
      %54 = sbr.rel (0) target = $region25
    $region24: #{tpu_custom_call.1} parent=1 // pred_region
      %55 = dma.done [#allocation3], 1024
    $region25: #{tpu_custom_call.1} parent=1 // pred_fallthru
      _
    // Predicated region
    $region26: #{tpu_custom_call.1} parent=1 // pred_check
      _
    $region27: #{tpu_custom_call.1} parent=1 // pred_check_branch
      %57 = sbr.rel (0) target = $region29
    $region28: #{tpu_custom_call.1} parent=1 // pred_region
      %58 = dma.done [#allocation6], 256
    $region29: #{tpu_custom_call.1} parent=1 // pred_fallthru
      _
    // Predicated region
    $region30: #{tpu_custom_call.1} parent=1 // pred_check
      _
    $region31: #{tpu_custom_call.1} parent=1 // pred_check_branch
      %60 = sbr.rel (0) target = $region33
    $region32: #{tpu_custom_call.1} parent=1 // pred_region
      %61 = dma.done [#allocation6], 2048
    $region33: #{tpu_custom_call.1} parent=1 // pred_fallthru
      _
    %v62 = vld [vmem:[%s2] sm:$0xff]
    %v63 = vld [vmem:[%s3] sm:$0xff]
    %v64 = vld [vmem:[#allocation7] sm:$0xff]
    %v65 = vld [vmem:[#allocation7 + $0x8] sm:$0xff]
    %v66 = vld [vmem:[#allocation7 + $0x10] sm:$0xff]
    %v67 = vld [vmem:[#allocation7 + $0x18] sm:$0xff]
    %v68 = vld [vmem:[#allocation7 + $0x20] sm:$0xff]
    %v69 = vld [vmem:[#allocation7 + $0x28] sm:$0xff]
    %v70 = vld [vmem:[#allocation7 + $0x30] sm:$0xff]
    %v71 = vld [vmem:[#allocation7 + $0x38] sm:$0xff]
    %v72 = vld [vmem:[#allocation7 + $0x40] sm:$0xff]
    %v73 = vld [vmem:[#allocation7 + $0x48] sm:$0xff]
    %v74 = vld [vmem:[#allocation7 + $0x50] sm:$0xff]
    %v75 = vld [vmem:[#allocation7 + $0x58] sm:$0xff]
    %v76 = vld [vmem:[#allocation7 + $0x60] sm:$0xff]
    %v77 = vld [vmem:[#allocation7 + $0x68] sm:$0xff]
    %v78 = vld [vmem:[#allocation7 + $0x70] sm:$0xff]
    %v79 = vld [vmem:[#allocation7 + $0x78] sm:$0xff]
    %v80 = vld [vmem:[#allocation2] sm:$0xff]
    %v81 = vld [vmem:[#allocation2 + $0x8] sm:$0xff]
    %v82 = vld [vmem:[#allocation2 + $0x10] sm:$0xff]
    %v83 = vld [vmem:[#allocation2 + $0x18] sm:$0xff]
    %v84 = vld [vmem:[#allocation5] sm:$0xff]
    %vm85 = vcmask 523264
    %v87 = vsel %vm85, %v84, 0
    %89 = vmatprep.subr.mxu0 %v65
    %90 = vmatpush1.msra.mxu0 %v64
    %91 = vmatprep.subr.mxu0 %v67
    %92 = vmatpush1.msra.mxu0 %v66
    %93 = vmatprep.subr.mxu0 %v69
    %94 = vmatpush1.msra.mxu0 %v68
    %95 = vmatprep.subr.mxu0 %v71
    %96 = vmatpush1.msra.mxu0 %v70
    %97 = vmatprep.subr.mxu0 %v73
    %98 = vmatpush1.msra.mxu0 %v72
    %99 = vmatprep.subr.mxu0 %v75
    %100 = vmatpush1.msra.mxu0 %v74
    %101 = vmatprep.subr.mxu0 %v77
    %102 = vmatpush1.msra.mxu0 %v76
    %103 = vmatprep.subr.mxu0 %v79
    %104 = vmatpush1.msra.mxu0 %v78
    %105 = vmatprep.subr.mxu0 0.0
    %106 = vmatpush1.msra.mxu0 0.0
    %107 = vmatprep.subr.mxu0 0.0
    %108 = vmatpush1.msra.mxu0 0.0
    %109 = vmatprep.subr.mxu0 0.0
    %110 = vmatpush1.msra.mxu0 0.0
    %111 = vmatprep.subr.mxu0 0.0
    %112 = vmatpush1.msra.mxu0 0.0
    %113 = vmatprep.subr.mxu0 0.0
    %114 = vmatpush1.msra.mxu0 0.0
    %115 = vmatprep.subr.mxu0 0.0
    %116 = vmatpush1.msra.mxu0 0.0
    %117 = vmatprep.subr.mxu0 0.0
    %118 = vmatpush1.msra.mxu0 0.0
    %119 = vmatprep.subr.mxu0 0.0
    %120 = vmatpush1.msra.mxu0 0.0
    %121 = vmatprep.subr.mxu0 0.0
    %122 = vmatpush1.msra.mxu0 0.0
    %123 = vmatprep.subr.mxu0 0.0
    %124 = vmatpush1.msra.mxu0 0.0
    %125 = vmatprep.subr.mxu0 0.0
    %126 = vmatpush1.msra.mxu0 0.0
    %127 = vmatprep.subr.mxu0 0.0
    %128 = vmatpush1.msra.mxu0 0.0
    %129 = vmatprep.subr.mxu0 0.0
    %130 = vmatpush1.msra.mxu0 0.0
    %131 = vmatprep.subr.mxu0 0.0
    %132 = vmatpush1.msra.mxu0 0.0
    %133 = vmatprep.subr.mxu0 0.0
    %134 = vmatpush1.msra.mxu0 0.0
    %135 = vmatprep.subr.mxu0 0.0
    %136 = vmatpush1.msra.mxu0 0.0
    %137 = vmatprep.subr.mxu0 0.0
    %138 = vmatpush1.msra.mxu0 0.0
    %139 = vmatprep.subr.mxu0 0.0
    %140 = vmatpush1.msra.mxu0 0.0
    %141 = vmatprep.subr.mxu0 0.0
    %142 = vmatpush1.msra.mxu0 0.0
    %143 = vmatprep.subr.mxu0 0.0
    %144 = vmatpush1.msra.mxu0 0.0
    %145 = vmatprep.subr.mxu0 0.0
    %146 = vmatpush1.msra.mxu0 0.0
    %147 = vmatprep.subr.mxu0 0.0
    %148 = vmatpush1.msra.mxu0 0.0
    %149 = vmatprep.subr.mxu0 0.0
    %150 = vmatpush1.msra.mxu0 0.0
    %151 = vmatprep.subr.mxu0 0.0
    %152 = vmatpush1.msra.mxu0 0.0
    %153 = vmatprep.mubr.f32.mxu0 0.0
    %154 = vmatmul.mubr.f32.gmra.mrb[0].mxu0 %v87
    %v155 = vpop.f32.mrb[0].mxu0
    %v156 = vadd.f32 0.0, %v155
    %v157 = vpop.f32.mrb[0].mxu0
    %v158 = vadd.f32 0.0, %v157
    %159 = vdwg.mxu0
    %vm160 = vcmask 130048
    %v162 = vsel %vm160, %v62, 0
    %164 = vmatprep.subr.mxu0 %v81
    %165 = vmatpush1.msra.mxu0 %v80
    %166 = vmatprep.subr.mxu0 %v83
    %167 = vmatpush1.msra.mxu0 %v82
    %168 = vmatprep.subr.mxu0 0.0
    %169 = vmatpush1.msra.mxu0 0.0
    %170 = vmatprep.subr.mxu0 0.0
    %171 = vmatpush1.msra.mxu0 0.0
    %172 = vmatprep.subr.mxu0 0.0
    %173 = vmatpush1.msra.mxu0 0.0
    %174 = vmatprep.subr.mxu0 0.0
    %175 = vmatpush1.msra.mxu0 0.0
    %176 = vmatprep.subr.mxu0 0.0
    %177 = vmatpush1.msra.mxu0 0.0
    %178 = vmatprep.subr.mxu0 0.0
    %179 = vmatpush1.msra.mxu0 0.0
    %180 = vmatprep.subr.mxu0 0.0
    %181 = vmatpush1.msra.mxu0 0.0
    %182 = vmatprep.subr.mxu0 0.0
    %183 = vmatpush1.msra.mxu0 0.0
    %184 = vmatprep.subr.mxu0 0.0
    %185 = vmatpush1.msra.mxu0 0.0
    %186 = vmatprep.subr.mxu0 0.0
    %187 = vmatpush1.msra.mxu0 0.0
    %188 = vmatprep.subr.mxu0 0.0
    %189 = vmatpush1.msra.mxu0 0.0
    %190 = vmatprep.subr.mxu0 0.0
    %191 = vmatpush1.msra.mxu0 0.0
    %192 = vmatprep.subr.mxu0 0.0
    %193 = vmatpush1.msra.mxu0 0.0
    %194 = vmatprep.subr.mxu0 0.0
    %195 = vmatpush1.msra.mxu0 0.0
    %196 = vmatprep.subr.mxu0 0.0
    %197 = vmatpush1.msra.mxu0 0.0
    %198 = vmatprep.subr.mxu0 0.0
    %199 = vmatpush1.msra.mxu0 0.0
    %200 = vmatprep.subr.mxu0 0.0
    %201 = vmatpush1.msra.mxu0 0.0
    %202 = vmatprep.subr.mxu0 0.0
    %203 = vmatpush1.msra.mxu0 0.0
    %204 = vmatprep.subr.mxu0 0.0
    %205 = vmatpush1.msra.mxu0 0.0
    %206 = vmatprep.subr.mxu0 0.0
    %207 = vmatpush1.msra.mxu0 0.0
    %208 = vmatprep.subr.mxu0 0.0
    %209 = vmatpush1.msra.mxu0 0.0
    %210 = vmatprep.subr.mxu0 0.0
    %211 = vmatpush1.msra.mxu0 0.0
    %212 = vmatprep.subr.mxu0 0.0
    %213 = vmatpush1.msra.mxu0 0.0
    %214 = vmatprep.subr.mxu0 0.0
    %215 = vmatpush1.msra.mxu0 0.0
    %216 = vmatprep.subr.mxu0 0.0
    %217 = vmatpush1.msra.mxu0 0.0
    %218 = vmatprep.subr.mxu0 0.0
    %219 = vmatpush1.msra.mxu0 0.0
    %220 = vmatprep.subr.mxu0 0.0
    %221 = vmatpush1.msra.mxu0 0.0
    %222 = vmatprep.subr.mxu0 0.0
    %223 = vmatpush1.msra.mxu0 0.0
    %224 = vmatprep.subr.mxu0 0.0
    %225 = vmatpush1.msra.mxu0 0.0
    %226 = vmatprep.subr.mxu0 0.0
    %227 = vmatpush1.msra.mxu0 0.0
    %228 = vmatprep.mubr.f32.mxu0 0.0
    %229 = vmatmul.mubr.f32.gmra.mrb[0].mxu0 %v162
    %v230 = vpop.f32.mrb[0].mxu0
    %v231 = vadd.f32 %v156, %v230
    %v232 = vpop.f32.mrb[0].mxu0
    %v233 = vadd.f32 %v158, %v232
    %234 = vdwg.mxu0
    %236 = vset.pattern.permute.xlu0 0
    %237 = vperm.xlu0 %236, %v63
    %v238 = vpop.permute.xlu0 %237
    %v240 = vadd.f32 %v231, %v238
    %v241 = vadd.f32 %v233, %v238
    %242 = vst [vmem:[#allocation8] sm:$0xff] %v240
    %243 = vst [vmem:[#allocation8 + $0x8] sm:$0xff] %v241
    %s244 = scalar_lea.vmem [#allocation2], 32
    %v245 = vld [vmem:[%s244] sm:$0xff]
    %v246 = vld [vmem:[%s244 + $0x8] sm:$0xff]
    %v247 = vld [vmem:[%s244 + $0x10] sm:$0xff]
    %v248 = vld [vmem:[%s244 + $0x18] sm:$0xff]
    %s249 = scalar_lea.vmem [#allocation5], 8
    %v250 = vld [vmem:[%s249] sm:$0xff]
    %v252 = vsel %vm85, %v250, 0
    %254 = vmatprep.subr.mxu0 %v65
    %255 = vmatpush1.msra.mxu0 %v64
    %256 = vmatprep.subr.mxu0 %v67
    %257 = vmatpush1.msra.mxu0 %v66
    %258 = vmatprep.subr.mxu0 %v69
    %259 = vmatpush1.msra.mxu0 %v68
    %260 = vmatprep.subr.mxu0 %v71
    %261 = vmatpush1.msra.mxu0 %v70
    %262 = vmatprep.subr.mxu0 %v73
    %263 = vmatpush1.msra.mxu0 %v72
    %264 = vmatprep.subr.mxu0 %v75
    %265 = vmatpush1.msra.mxu0 %v74
    %266 = vmatprep.subr.mxu0 %v77
    %267 = vmatpush1.msra.mxu0 %v76
    %268 = vmatprep.subr.mxu0 %v79
    %269 = vmatpush1.msra.mxu0 %v78
    %270 = vmatprep.subr.mxu0 0.0
    %271 = vmatpush1.msra.mxu0 0.0
    %272 = vmatprep.subr.mxu0 0.0
    %273 = vmatpush1.msra.mxu0 0.0
    %274 = vmatprep.subr.mxu0 0.0
    %275 = vmatpush1.msra.mxu0 0.0
    %276 = vmatprep.subr.mxu0 0.0
    %277 = vmatpush1.msra.mxu0 0.0
    %278 = vmatprep.subr.mxu0 0.0
    %279 = vmatpush1.msra.mxu0 0.0
    %280 = vmatprep.subr.mxu0 0.0
    %281 = vmatpush1.msra.mxu0 0.0
    %282 = vmatprep.subr.mxu0 0.0
    %283 = vmatpush1.msra.mxu0 0.0
    %284 = vmatprep.subr.mxu0 0.0
    %285 = vmatpush1.msra.mxu0 0.0
    %286 = vmatprep.subr.mxu0 0.0
    %287 = vmatpush1.msra.mxu0 0.0
    %288 = vmatprep.subr.mxu0 0.0
    %289 = vmatpush1.msra.mxu0 0.0
    %290 = vmatprep.subr.mxu0 0.0
    %291 = vmatpush1.msra.mxu0 0.0
    %292 = vmatprep.subr.mxu0 0.0
    %293 = vmatpush1.msra.mxu0 0.0
    %294 = vmatprep.subr.mxu0 0.0
    %295 = vmatpush1.msra.mxu0 0.0
    %296 = vmatprep.subr.mxu0 0.0
    %297 = vmatpush1.msra.mxu0 0.0
    %298 = vmatprep.subr.mxu0 0.0
    %299 = vmatpush1.msra.mxu0 0.0
    %300 = vmatprep.subr.mxu0 0.0
    %301 = vmatpush1.msra.mxu0 0.0
    %302 = vmatprep.subr.mxu0 0.0
    %303 = vmatpush1.msra.mxu0 0.0
    %304 = vmatprep.subr.mxu0 0.0
    %305 = vmatpush1.msra.mxu0 0.0
    %306 = vmatprep.subr.mxu0 0.0
    %307 = vmatpush1.msra.mxu0 0.0
    %308 = vmatprep.subr.mxu0 0.0
    %309 = vmatpush1.msra.mxu0 0.0
    %310 = vmatprep.subr.mxu0 0.0
    %311 = vmatpush1.msra.mxu0 0.0
    %312 = vmatprep.subr.mxu0 0.0
    %313 = vmatpush1.msra.mxu0 0.0
    %314 = vmatprep.subr.mxu0 0.0
    %315 = vmatpush1.msra.mxu0 0.0
    %316 = vmatprep.subr.mxu0 0.0
    %317 = vmatpush1.msra.mxu0 0.0
    %318 = vmatprep.mubr.f32.mxu0 0.0
    %319 = vmatmul.mubr.f32.gmra.mrb[0].mxu0 %v252
    %v320 = vpop.f32.mrb[0].mxu0
    %v321 = vadd.f32 0.0, %v320
    %v322 = vpop.f32.mrb[0].mxu0
    %v323 = vadd.f32 0.0, %v322
    %324 = vdwg.mxu0
    %325 = vmatprep.subr.mxu0 %v246
    %326 = vmatpush1.msra.mxu0 %v245
    %327 = vmatprep.subr.mxu0 %v248
    %328 = vmatpush1.msra.mxu0 %v247
    %329 = vmatprep.subr.mxu0 0.0
    %330 = vmatpush1.msra.mxu0 0.0
    %331 = vmatprep.subr.mxu0 0.0
    %332 = vmatpush1.msra.mxu0 0.0
    %333 = vmatprep.subr.mxu0 0.0
    %334 = vmatpush1.msra.mxu0 0.0
    %335 = vmatprep.subr.mxu0 0.0
    %336 = vmatpush1.msra.mxu0 0.0
    %337 = vmatprep.subr.mxu0 0.0
    %338 = vmatpush1.msra.mxu0 0.0
    %339 = vmatprep.subr.mxu0 0.0
    %340 = vmatpush1.msra.mxu0 0.0
    %341 = vmatprep.subr.mxu0 0.0
    %342 = vmatpush1.msra.mxu0 0.0
    %343 = vmatprep.subr.mxu0 0.0
    %344 = vmatpush1.msra.mxu0 0.0
    %345 = vmatprep.subr.mxu0 0.0
    %346 = vmatpush1.msra.mxu0 0.0
    %347 = vmatprep.subr.mxu0 0.0
    %348 = vmatpush1.msra.mxu0 0.0
    %349 = vmatprep.subr.mxu0 0.0
    %350 = vmatpush1.msra.mxu0 0.0
    %351 = vmatprep.subr.mxu0 0.0
    %352 = vmatpush1.msra.mxu0 0.0
    %353 = vmatprep.subr.mxu0 0.0
    %354 = vmatpush1.msra.mxu0 0.0
    %355 = vmatprep.subr.mxu0 0.0
    %356 = vmatpush1.msra.mxu0 0.0
    %357 = vmatprep.subr.mxu0 0.0
    %358 = vmatpush1.msra.mxu0 0.0
    %359 = vmatprep.subr.mxu0 0.0
    %360 = vmatpush1.msra.mxu0 0.0
    %361 = vmatprep.subr.mxu0 0.0
    %362 = vmatpush1.msra.mxu0 0.0
    %363 = vmatprep.subr.mxu0 0.0
    %364 = vmatpush1.msra.mxu0 0.0
    %365 = vmatprep.subr.mxu0 0.0
    %366 = vmatpush1.msra.mxu0 0.0
    %367 = vmatprep.subr.mxu0 0.0
    %368 = vmatpush1.msra.mxu0 0.0
    %369 = vmatprep.subr.mxu0 0.0
    %370 = vmatpush1.msra.mxu0 0.0
    %371 = vmatprep.subr.mxu0 0.0
    %372 = vmatpush1.msra.mxu0 0.0
    %373 = vmatprep.subr.mxu0 0.0
    %374 = vmatpush1.msra.mxu0 0.0
    %375 = vmatprep.subr.mxu0 0.0
    %376 = vmatpush1.msra.mxu0 0.0
    %377 = vmatprep.subr.mxu0 0.0
    %378 = vmatpush1.msra.mxu0 0.0
    %379 = vmatprep.subr.mxu0 0.0
    %380 = vmatpush1.msra.mxu0 0.0
    %381 = vmatprep.subr.mxu0 0.0
    %382 = vmatpush1.msra.mxu0 0.0
    %383 = vmatprep.subr.mxu0 0.0
    %384 = vmatpush1.msra.mxu0 0.0
    %385 = vmatprep.subr.mxu0 0.0
    %386 = vmatpush1.msra.mxu0 0.0
    %387 = vmatprep.subr.mxu0 0.0
    %388 = vmatpush1.msra.mxu0 0.0
    %389 = vmatprep.mubr.f32.mxu0 0.0
    %390 = vmatmul.mubr.f32.gmra.mrb[0].mxu0 %v162
    %v391 = vpop.f32.mrb[0].mxu0
    %v392 = vadd.f32 %v321, %v391
    %v393 = vpop.f32.mrb[0].mxu0
    %v394 = vadd.f32 %v323, %v393
    %395 = vdwg.mxu0
    %v396 = vadd.f32 %v392, %v238
    %v397 = vadd.f32 %v394, %v238
    %s398 = scalar_lea.vmem [#allocation8], 16
    %399 = vst [vmem:[%s398] sm:$0xff] %v396
    %400 = vst [vmem:[%s398 + $0x8] sm:$0xff] %v397
    // Predicated region
    $region34: #{tpu_custom_call.1} parent=1 // pred_check
      _
    $region35: #{tpu_custom_call.1} parent=1 // pred_check_branch
      %402 = sbr.rel (0) target = $region37
    $region36: #{tpu_custom_call.1} parent=1 // pred_region
      %s404 = ssub.s32 512, 512
      %405 = vsyncadd [#allocation4], %s404
      %s406 = sshll.u32 [#allocation8], 4
      %s407 = int_to_ptr.vmem [resolvable:$true] %s406
      %412 = dma.vmem_to_hbm [thread:$0]  %s407, 512, %s5, [#allocation4], 256, 256, 16
    $region37: #{tpu_custom_call.1} parent=1 // pred_fallthru
      _
    // Predicated region
    $region38: #{tpu_custom_call.1} parent=1 // pred_check
      _
    $region39: #{tpu_custom_call.1} parent=1 // pred_check_branch
      %414 = sbr.rel (0) target = $region41
    $region40: #{tpu_custom_call.1} parent=1 // pred_region
      %415 = dma.done [#allocation4], 512
    $region41: #{tpu_custom_call.1} parent=1 // pred_fallthru
      _
    %416 = vsyncpa [#allocation3], 1
    %417 = vsyncpa [#allocation6], 1
    %418 = vsyncpa [#allocation4], 1

</llo_original>
